<compile_context>
chip_gen: v6e
topology: v6e:2x2x1
jax: 0.10.0
libtpu: 0.0.40
codegen_flags: <defaults>
</compile_context>

<pallas_src>
import functools

import jax
import jax.numpy as jnp
from jax.experimental import pallas as pl
from jax.experimental.pallas import tpu as pltpu


# ----------------------------------------------------------------------------
# kernels
# ----------------------------------------------------------------------------
def _gcn_dep_kernel(hid_ref, dep_ref, invd_ref, b_ref, out_ref, *, use_activation):
    hidden = hid_ref[0]                      # (Np, Fp)  compute dtype, batch-resident
    dep = dep_ref[0]                         # (TN, Np)  compute dtype
    inv_d = invd_ref[0]                      # (TN, 1)   f32, exact 1/(deg+1)
    out = jnp.dot(dep, hidden, preferred_element_type=jnp.float32) * inv_d
    out = out + b_ref[...]                   # (1, Fp) f32 bias broadcast
    if use_activation:
        out = jnp.maximum(out, 0.0)          # ReLU
    out_ref[0] = out.astype(out_ref.dtype)


def _gcn_dual_kernel(hid_ref, dep_ref, lat_ref, invd_ref, invl_ref, b_ref, out_ref,
                     *, lambda_p, use_activation):
    hidden = hid_ref[0]                      # (Np, Fp)
    b = b_ref[...]                           # (1, Fp) f32

    dep_out = (jnp.dot(dep_ref[0], hidden, preferred_element_type=jnp.float32)
               * invd_ref[0] + b)
    lat_out = (jnp.dot(lat_ref[0], hidden, preferred_element_type=jnp.float32)
               * invl_ref[0] + b)

    gate = (1.0 - lambda_p) * jax.nn.sigmoid(lat_out)      # sigmoid -> EUP slot
    final = dep_out + gate * (lat_out - dep_out)            # == (1-g)*dep + g*lat
    if use_activation:
        final = jnp.maximum(final, 0.0)
    out_ref[0] = final.astype(out_ref.dtype)


# ----------------------------------------------------------------------------
# tiling / VMEM planning
# ----------------------------------------------------------------------------
def _vmem_capacity_bytes():
    try:
        info = pltpu.get_tpu_info()
        cap = getattr(info, "vmem_capacity_bytes", None)
        if cap:
            return int(cap)
    except Exception:
        pass
    return 64 * 1024 * 1024   # conservative per-core fallback (v7x)


def _plan_tiling(Np, Fp, in_dsize, out_dsize, n_adj):
    """Pick row tile TN, hidden buffer count and an explicit VMEM budget."""
    cap = _vmem_capacity_bytes()
    budget = cap // 2                         # leave headroom for Mosaic internals
    hid_bytes = Np * Fp * in_dsize
    # Single-buffer the batch-resident hidden slab once double-buffering stops
    # being cheap (saves N*Fp of VMEM; cost is one exposed DMA per batch change).
    hid_bufs = 1 if (2 * hid_bytes > (8 << 20)) else 2

    def footprint(tn):
        return (hid_bufs * hid_bytes
                + 2 * n_adj * tn * Np * in_dsize    # adjacency tiles, double buffered
                + 2 * n_adj * tn * 4                # inv-denominator tiles (f32)
                + 2 * tn * Fp * out_dsize           # output tile, double buffered
                + 2 * Fp * 4)                       # bias

    tn = 8
    for cand in (512, 256, 128, 64, 32, 16, 8):     # Np is a multiple of 128
        if Np % cand == 0 and footprint(cand) <= budget:
            tn = cand
            break

    # Explicit scoped-VMEM limit: footprint + headroom for the f32 (TN, Fp)
    # intermediates and Mosaic internal scratch.
    headroom = 8 * tn * Fp * 4 + (2 << 20)
    vmem_limit = min(cap, max(32 << 20, int(footprint(tn) * 1.25) + headroom))
    return tn, hid_bufs, vmem_limit


# ----------------------------------------------------------------------------
# wrapper
# ----------------------------------------------------------------------------
def dual_graph_convolution(text, dep_adj, weight, bias=None, latent_adj=None,
                           lambda_p=0.8, use_activation=True,
                           compute_dtype=jnp.bfloat16):
    """JAX/Pallas equivalent of DualGraphConvolution.forward.

    text:       (B, N, Fin)
    dep_adj:    (B, N, N)
    latent_adj: (B, N, N) or None
    weight:     (Fin, Fout)
    bias:       (Fout,) or None
    compute_dtype: dtype for the adjacency/hidden HBM streams and MXU inputs
                   (bf16 by default; None keeps the input dtype).
    returns:    (B, N, Fout) in text.dtype
    """
    B, N, Fin = text.shape
    Fout = weight.shape[1]
    use_latent = (latent_adj is not None) and (float(lambda_p) < 1.0)
    kdtype = jnp.dtype(compute_dtype) if compute_dtype is not None else jnp.dtype(text.dtype)
    out_dtype = jnp.dtype(text.dtype)

    # ---- pad feature dim and node dim to multiples of 128 (lane-dense) ------
    Fp = pl.cdiv(Fout, 128) * 128
    Np = pl.cdiv(N, 128) * 128
    pad_f = Fp - Fout
    pad_n = Np - N

    w = jnp.pad(weight, ((0, 0), (0, pad_f))) if pad_f else weight
    if bias is None:
        b2 = jnp.zeros((1, Fp), jnp.float32)
    else:
        b2 = bias.astype(jnp.float32).reshape(1, Fout)
        if pad_f:
            b2 = jnp.pad(b2, ((0, 0), (0, pad_f)))

    # ---- hidden = text @ weight: one big MXU matmul, hoisted to XLA ----------
    hidden = jnp.matmul(text.reshape(B * N, Fin), w,
                        preferred_element_type=jnp.float32)
    hidden = hidden.astype(kdtype).reshape(B, N, Fp)
    if pad_n:
        hidden = jnp.pad(hidden, ((0, 0), (0, pad_n), (0, 0)))

    # ---- exact f32 inverse row-degree denominators, hoisted out of the kernel
    inv_dep = 1.0 / (jnp.sum(dep_adj.astype(jnp.float32), axis=2, keepdims=True) + 1.0)
    dep = dep_adj.astype(kdtype)
    if pad_n:
        dep = jnp.pad(dep, ((0, 0), (0, pad_n), (0, pad_n)))
        inv_dep = jnp.pad(inv_dep, ((0, 0), (0, pad_n), (0, 0)))

    if use_latent:
        inv_lat = 1.0 / (jnp.sum(latent_adj.astype(jnp.float32), axis=2, keepdims=True) + 1.0)
        lat = latent_adj.astype(kdtype)
        if pad_n:
            lat = jnp.pad(lat, ((0, 0), (0, pad_n), (0, pad_n)))
            inv_lat = jnp.pad(inv_lat, ((0, 0), (0, pad_n), (0, 0)))

    # ---- VMEM-aware tiling ----------------------------------------------------
    n_adj = 2 if use_latent else 1
    TN, hid_bufs, vmem_limit = _plan_tiling(Np, Fp, kdtype.itemsize,
                                            out_dtype.itemsize, n_adj)
    grid = (B, Np // TN)

    hid_kwargs = {}
    if hid_bufs == 1:
        hid_kwargs["pipeline_mode"] = pl.Buffered(1)   # single-buffer the resident slab
    hid_spec = pl.BlockSpec((1, Np, Fp), lambda b, t: (b, 0, 0), **hid_kwargs)
    dep_spec = pl.BlockSpec((1, TN, Np), lambda b, t: (b, t, 0))
    lat_spec = pl.BlockSpec((1, TN, Np), lambda b, t: (b, t, 0))
    inv_spec = pl.BlockSpec((1, TN, 1), lambda b, t: (b, t, 0))
    bias_spec = pl.BlockSpec((1, Fp), lambda b, t: (0, 0))
    out_spec = pl.BlockSpec((1, TN, Fp), lambda b, t: (b, t, 0))

    if use_latent:
        kernel = functools.partial(_gcn_dual_kernel, lambda_p=float(lambda_p),
                                   use_activation=bool(use_activation))
        in_specs = [hid_spec, dep_spec, lat_spec, inv_spec, inv_spec, bias_spec]
        args = (hidden, dep, lat, inv_dep, inv_lat, b2)
    else:
        kernel = functools.partial(_gcn_dep_kernel,
                                   use_activation=bool(use_activation))
        in_specs = [hid_spec, dep_spec, inv_spec, bias_spec]
        args = (hidden, dep, inv_dep, b2)

    # ---- advisory cost estimate for the XLA scheduler --------------------------
    flops = 2 * B * Np * Np * Fp * n_adj + 6 * B * Np * Fp
    transcendentals = B * Np * Fp if use_latent else 0
    bytes_accessed = (n_adj * B * Np * Np * kdtype.itemsize      # adjacency stream
                      + B * Np * Fp * kdtype.itemsize            # hidden (read once/batch)
                      + n_adj * B * Np * 4                       # inv denominators
                      + B * Np * Fp * out_dtype.itemsize         # output
                      + Fp * 4)                                  # bias
    cost = pl.CostEstimate(flops=int(flops),
                           transcendentals=int(transcendentals),
                           bytes_accessed=int(bytes_accessed))

    out_padded = pl.pallas_call(
        kernel,
        out_shape=jax.ShapeDtypeStruct((B, Np, Fp), out_dtype),
        grid_spec=pltpu.PrefetchScalarGridSpec(
            num_scalar_prefetch=0,
            grid=grid,
            in_specs=in_specs,
            out_specs=out_spec),
        compiler_params=pltpu.CompilerParams(
            dimension_semantics=("parallel", "parallel"),
            vmem_limit_bytes=int(vmem_limit)),
        cost_estimate=cost,
    )(*args)

    if pad_n or pad_f:
        return out_padded[:, :N, :Fout]
    return out_padded


# ----------------------------------------------------------------------------
# pure-JAX reference (mirrors the PyTorch module, all f32)
# ----------------------------------------------------------------------------
def _reference(text, dep_adj, weight, bias, latent_adj, lambda_p, use_activation):
    hidden = jnp.matmul(text, weight)
    denom = jnp.sum(dep_adj, axis=2, keepdims=True) + 1.0
    dep_out = jnp.matmul(dep_adj, hidden) / denom
    if bias is not None:
        dep_out = dep_out + bias
    final = dep_out
    if latent_adj is not None and lambda_p < 1.0:
        denom2 = jnp.sum(latent_adj, axis=2, keepdims=True) + 1.0
        lat_out = jnp.matmul(latent_adj, hidden) / denom2
        if bias is not None:
            lat_out = lat_out + bias
        gate = (1.0 - lambda_p) * jax.nn.sigmoid(lat_out)
        final = (1.0 - gate) * dep_out + gate * lat_out
    if use_activation:
        final = jax.nn.relu(final)
    return final


if __name__ == "__main__":
    key = jax.random.PRNGKey(0)
    lambda_p = 0.8

    # --- case 1: dual path, f32 compute (exact normalization -> tight tol) ---
    B, N, Fin, Fout = 2, 8, 16, 32
    k1, k2, k3, k4, k5 = jax.random.split(key, 5)
    text = jax.random.normal(k1, (B, N, Fin), dtype=jnp.float32)
    dep_adj = (jax.random.uniform(k2, (B, N, N)) > 0.5).astype(jnp.float32)
    latent_adj = jax.random.uniform(k3, (B, N, N), dtype=jnp.float32)
    weight = jax.random.normal(k4, (Fin, Fout), dtype=jnp.float32) * 0.1
    bias = jax.random.normal(k5, (Fout,), dtype=jnp.float32) * 0.1

    out = jax.block_until_ready(
        dual_graph_convolution(text, dep_adj, weight, bias, latent_adj=latent_adj,
                               lambda_p=lambda_p, use_activation=True,
                               compute_dtype=None))
    ref = _reference(text, dep_adj, weight, bias, latent_adj, lambda_p, True)
    assert out.shape == (B, N, Fout)
    assert jnp.allclose(out, ref, atol=1e-4, rtol=1e-4), "mismatch (dual, f32)"

    # --- case 2: dual path, default bf16 compute (relaxed tol) ---------------
    out_bf = jax.block_until_ready(
        dual_graph_convolution(text, dep_adj, weight, bias, latent_adj=latent_adj,
                               lambda_p=lambda_p, use_activation=True))
    assert jnp.allclose(out_bf, ref, atol=2e-2, rtol=2e-2), "mismatch (dual, bf16)"

    # --- case 3: no latent graph, no activation (no dummy latent DMA) --------
    out2 = jax.block_until_ready(
        dual_graph_convolution(text, dep_adj, weight, bias, latent_adj=None,
                               lambda_p=lambda_p, use_activation=False))
    ref2 = _reference(text, dep_adj, weight, bias, None, lambda_p, False)
    assert jnp.allclose(out2, ref2, atol=2e-2, rtol=2e-2), "mismatch (no-latent)"

    # --- case 4: awkward sizes -> N and Fout padded, multi row-tile grid ------
    B3, N3, Fin3, Fout3 = 2, 300, 12, 72      # Np=384 -> TN=128, 3 row tiles
    j1, j2, j3, j4, j5 = jax.random.split(jax.random.PRNGKey(1), 5)
    text3 = jax.random.normal(j1, (B3, N3, Fin3), dtype=jnp.float32)
    dep3 = (jax.random.uniform(j2, (B3, N3, N3)) > 0.5).astype(jnp.float32)
    lat3 = jax.random.uniform(j3, (B3, N3, N3), dtype=jnp.float32)
    w3 = jax.random.normal(j4, (Fin3, Fout3), dtype=jnp.float32) * 0.1
    b3 = jax.random.normal(j5, (Fout3,), dtype=jnp.float32) * 0.1
    out3 = jax.block_until_ready(
        dual_graph_convolution(text3, dep3, w3, b3, latent_adj=lat3,
                               lambda_p=lambda_p, use_activation=True))
    ref3 = _reference(text3, dep3, w3, b3, lat3, lambda_p, True)
    assert out3.shape == (B3, N3, Fout3)
    assert jnp.allclose(out3, ref3, atol=2e-2, rtol=2e-2), "mismatch (padded/tiled)"

    print("KERNEL_OK")
</pallas_src>

<mosaic_0001>
module attributes {stable_mosaic.version = 11 : i64} {
  func.func @_gcn_dual_kernel(%arg0: i32, %arg1: i32, %arg2: memref<1x128x128xf32, #tpu.memory_space<vmem>>, %arg3: memref<1x128x128xf32, #tpu.memory_space<vmem>>, %arg4: memref<1x128x128xf32, #tpu.memory_space<vmem>>, %arg5: memref<1x128x1xf32, #tpu.memory_space<vmem>>, %arg6: memref<1x128x1xf32, #tpu.memory_space<vmem>>, %arg7: memref<1x128xf32, #tpu.memory_space<vmem>>, %arg8: memref<1x128x128xf32, #tpu.memory_space<vmem>>) attributes {dimension_semantics = [#tpu.dimension_semantics<parallel>, #tpu.dimension_semantics<parallel>], iteration_bounds = array<i64: 2, 1>, scalar_prefetch = 0 : i64, scratch_operands = 0 : i64, tpu.core_type = #tpu.core_type<tc>, window_params = [{transform_indices = @transform_0, window_bounds = array<i64: 1, 128, 128>}, {transform_indices = @transform_1, window_bounds = array<i64: 1, 128, 128>}, {transform_indices = @transform_2, window_bounds = array<i64: 1, 128, 128>}, {transform_indices = @transform_3, window_bounds = array<i64: 1, 128, 1>}, {transform_indices = @transform_4, window_bounds = array<i64: 1, 128, 1>}, {pipeline_mode = #tpu.pipeline_mode<synchronous>, transform_indices = @transform_5, window_bounds = array<i64: 1, 128>}, {transform_indices = @transform_6, window_bounds = array<i64: 1, 128, 128>}]} {
    %c0 = arith.constant 0 : index
    %c0_0 = arith.constant 0 : index
    %c0_1 = arith.constant 0 : index
    %0 = vector.load %arg2[%c0, %c0_0, %c0_1] : memref<1x128x128xf32, #tpu.memory_space<vmem>>, vector<1x128x128xf32>
    %1 = vector.shape_cast %0 : vector<1x128x128xf32> to vector<128x128xf32>
    %c0_2 = arith.constant 0 : index
    %c0_3 = arith.constant 0 : index
    %2 = vector.load %arg7[%c0_2, %c0_3] : memref<1x128xf32, #tpu.memory_space<vmem>>, vector<1x128xf32>
    %c0_4 = arith.constant 0 : index
    %c0_5 = arith.constant 0 : index
    %c0_6 = arith.constant 0 : index
    %3 = vector.load %arg3[%c0_4, %c0_5, %c0_6] : memref<1x128x128xf32, #tpu.memory_space<vmem>>, vector<1x128x128xf32>
    %4 = vector.shape_cast %3 : vector<1x128x128xf32> to vector<128x128xf32>
    %cst = arith.constant dense<0.000000e+00> : vector<128x128xf32>
    %5 = tpu.matmul %4, %1, %cst {dimension_numbers = #tpu.dot_dimension_numbers<[1], [0], [0], [1], [0, 0, 1, 1], [], []>} : vector<128x128xf32>, vector<128x128xf32>, vector<128x128xf32> -> vector<128x128xf32>
    %c0_7 = arith.constant 0 : index
    %c0_8 = arith.constant 0 : index
    %c0_9 = arith.constant 0 : index
    %6 = vector.load %arg5[%c0_7, %c0_8, %c0_9] : memref<1x128x1xf32, #tpu.memory_space<vmem>>, vector<1x128x1xf32>
    %7 = vector.shape_cast %6 : vector<1x128x1xf32> to vector<128x1xf32>
    %8 = vector.broadcast %7 : vector<128x1xf32> to vector<128x128xf32>
    %9 = arith.mulf %5, %8 : vector<128x128xf32>
    %10 = vector.broadcast %2 : vector<1x128xf32> to vector<128x128xf32>
    %11 = arith.addf %9, %10 : vector<128x128xf32>
    %c0_10 = arith.constant 0 : index
    %c0_11 = arith.constant 0 : index
    %c0_12 = arith.constant 0 : index
    %12 = vector.load %arg4[%c0_10, %c0_11, %c0_12] : memref<1x128x128xf32, #tpu.memory_space<vmem>>, vector<1x128x128xf32>
    %13 = vector.shape_cast %12 : vector<1x128x128xf32> to vector<128x128xf32>
    %cst_13 = arith.constant dense<0.000000e+00> : vector<128x128xf32>
    %14 = tpu.matmul %13, %1, %cst_13 {dimension_numbers = #tpu.dot_dimension_numbers<[1], [0], [0], [1], [0, 0, 1, 1], [], []>} : vector<128x128xf32>, vector<128x128xf32>, vector<128x128xf32> -> vector<128x128xf32>
    %c0_14 = arith.constant 0 : index
    %c0_15 = arith.constant 0 : index
    %c0_16 = arith.constant 0 : index
    %15 = vector.load %arg6[%c0_14, %c0_15, %c0_16] : memref<1x128x1xf32, #tpu.memory_space<vmem>>, vector<1x128x1xf32>
    %16 = vector.shape_cast %15 : vector<1x128x1xf32> to vector<128x1xf32>
    %17 = vector.broadcast %16 : vector<128x1xf32> to vector<128x128xf32>
    %18 = arith.mulf %14, %17 : vector<128x128xf32>
    %19 = vector.broadcast %2 : vector<1x128xf32> to vector<128x128xf32>
    %20 = arith.addf %18, %19 : vector<128x128xf32>
    %21 = arith.negf %20 : vector<128x128xf32>
    %22 = math.exp %21 : vector<128x128xf32>
    %cst_17 = arith.constant 1.000000e+00 : f32
    %23 = vector.broadcast %cst_17 : f32 to vector<128x128xf32>
    %24 = arith.addf %23, %22 : vector<128x128xf32>
    %25 = arith.divf %23, %24 : vector<128x128xf32>
    %cst_18 = arith.constant 2.000000e-01 : f32
    %26 = vector.broadcast %cst_18 : f32 to vector<128x128xf32>
    %27 = arith.mulf %26, %25 : vector<128x128xf32>
    %28 = arith.subf %20, %11 : vector<128x128xf32>
    %29 = arith.mulf %27, %28 : vector<128x128xf32>
    %30 = arith.addf %11, %29 : vector<128x128xf32>
    %cst_19 = arith.constant 0.000000e+00 : f32
    %31 = vector.broadcast %cst_19 : f32 to vector<128x128xf32>
    %32 = arith.maximumf %30, %31 : vector<128x128xf32>
    %c0_20 = arith.constant 0 : index
    %c0_21 = arith.constant 0 : index
    %c0_22 = arith.constant 0 : index
    %33 = vector.load %arg8[%c0_20, %c0_21, %c0_22] : memref<1x128x128xf32, #tpu.memory_space<vmem>>, vector<1x128x128xf32>
    %34 = vector.shape_cast %33 : vector<1x128x128xf32> to vector<128x128xf32>
    %35 = vector.shape_cast %32 : vector<128x128xf32> to vector<1x128x128xf32>
    tpu.vector_store %arg8[%c0_20, %c0_21, %c0_22], %35 {strides = array<i32>} : memref<1x128x128xf32, #tpu.memory_space<vmem>>, vector<1x128x128xf32>,
    return
  }
  func.func @transform_0(%arg0: i32, %arg1: i32) -> (i32, i32, i32) {
    %c0_i32 = arith.constant 0 : i32
    %c0_i32_0 = arith.constant 0 : i32
    %c0_i32_1 = arith.constant 0 : i32
    return %arg0, %c0_i32, %c0_i32_0 : i32, i32, i32
  }
  func.func @transform_1(%arg0: i32, %arg1: i32) -> (i32, i32, i32) {
    %c0_i32 = arith.constant 0 : i32
    %c0_i32_0 = arith.constant 0 : i32
    return %arg0, %arg1, %c0_i32 : i32, i32, i32
  }
  func.func @transform_2(%arg0: i32, %arg1: i32) -> (i32, i32, i32) {
    %c0_i32 = arith.constant 0 : i32
    %c0_i32_0 = arith.constant 0 : i32
    return %arg0, %arg1, %c0_i32 : i32, i32, i32
  }
  func.func @transform_3(%arg0: i32, %arg1: i32) -> (i32, i32, i32) {
    %c0_i32 = arith.constant 0 : i32
    %c0_i32_0 = arith.constant 0 : i32
    return %arg0, %arg1, %c0_i32 : i32, i32, i32
  }
  func.func @transform_4(%arg0: i32, %arg1: i32) -> (i32, i32, i32) {
    %c0_i32 = arith.constant 0 : i32
    %c0_i32_0 = arith.constant 0 : i32
    return %arg0, %arg1, %c0_i32 : i32, i32, i32
  }
  func.func @transform_5(%arg0: i32, %arg1: i32) -> (i32, i32) {
    %c0_i32 = arith.constant 0 : i32
    %c0_i32_0 = arith.constant 0 : i32
    %c0_i32_1 = arith.constant 0 : i32
    return %c0_i32, %c0_i32_0 : i32, i32
  }
  func.func @transform_6(%arg0: i32, %arg1: i32) -> (i32, i32, i32) {
    %c0_i32 = arith.constant 0 : i32
    %c0_i32_0 = arith.constant 0 : i32
    return %arg0, %arg1, %c0_i32 : i32, i32, i32
  }
}

</mosaic_0001>

<llo_original>
// kernel: tpu_custom_call.1
$region0: #{tpu_custom_call.1}
  #allocation0 [shape = 'u32[]', space=smem, size = 0x4, offset = 0x4, fixed_abs, tag = 'smem constant byte address 0x4 - core index']
  #allocation1 [shape = 'u32[144,128]{1,0:T(1,128)}', space=vmem, size = 0x12000, scoped, tag = 'internal scratch']
  %s0 = inlined_call_operand.vmem [shape: f32[2,128,128], index: 0, kind: input, shape index: {}]
  %s1 = inlined_call_operand.vmem [shape: f32[2,128,128], index: 1, kind: input, shape index: {}]
  %s2 = inlined_call_operand.hbm [shape: f32[2,128,128], index: 2, kind: input, shape index: {}]
  %s3 = inlined_call_operand.vmem [shape: f32[2,128,1], index: 3, kind: input, shape index: {}]
  %s4 = inlined_call_operand.vmem [shape: f32[2,128,1], index: 4, kind: input, shape index: {}]
  %s5 = inlined_call_operand.vmem [shape: f32[1,128], index: 5, kind: input, shape index: {}]
  %s6 = inlined_call_operand.hbm [shape: f32[2,128,128], index: 6, kind: output, shape index: {}]
  %s7 = sld [smem:[#allocation0]]
  $region61: #{tpu_custom_call.1} parent=0
    _
  %s9 = ssub.s32 1, %s7
  %s10 = scalar_select 0, %s9, %s7
  $region1: #{tpu_custom_call.1} parent=0
    #allocation2 [shape = 'u8[131072]{0}', space=vmem, size = 0x20000, scoped, tag = 'input window, operand 2']
    #allocation3 [shape = 's32[2]{0}', space=sflag, size = 0x8, scoped, tag = 'scoped memory for tpu_custom_call.1']
    #allocation4 [shape = 's32[2]{0}', space=sflag, size = 0x8, scoped, tag = 'scoped memory for tpu_custom_call.1']
    #allocation5 [shape = 'u8[131072]{0}', space=vmem, size = 0x20000, scoped, tag = 'output window, operand 0']
    %11 = vsyncpa [#allocation3], 0
    %s12 = scalar_lea.sflag [#allocation3], 1
    %13 = vsyncpa %s12, 0
    %14 = vsyncpa [#allocation4], 0
    %s15 = scalar_lea.sflag [#allocation4], 1
    %16 = vsyncpa %s15, 0
    loop: start=0, step=1, limit=4
    $region2: #{tpu_custom_call.1} parent=1 // loop_pre_header
      _
    $region3: #{tpu_custom_call.1} parent=1 // loop_header
      %s18 = sphi 0, %s22
      %p19 = scmp.ge.s32.totalorder %s18, 4
      %s25 = sphi 0, %s37
      %s26 = sphi 0, %s33
      %s27 = sphi 0, %s25
      %s28 = sphi 0, %s26
      %s29 = sphi 0, %s27
      %s30 = sphi 0, %s28
      %s40 = sphi 0, %s42
      %s43 = sphi 0, %s40
      %s44 = sphi 0, %s43
      %s60 = sphi 0, %s44
      %s68 = sphi 0, %s70
      %s71 = sphi 0, %s68
      %s72 = sphi 0, %s71
      %s88 = sphi 0, %s72
      %s96 = sphi 0, %s98
      %s99 = sphi 0, %s96
      %s100 = sphi 0, %s99
      %s116 = sphi 0, %s100
      %s124 = sphi 0, %s126
      %s127 = sphi 0, %s124
      %s128 = sphi 0, %s127
      %s144 = sphi 0, %s128
      %s152 = sphi 0, %s154
      %s155 = sphi 0, %s152
      %s156 = sphi 0, %s155
      %s172 = sphi 0, %s156
      %s176 = sphi 0, %s176
      %s178 = sphi 0, %s176
      %s179 = sphi 0, %s178
      %s193 = sphi 0, %s179
      %s201 = sphi 0, %s203
      %s204 = sphi 0, %s201
      %s205 = sphi 0, %s204
      %s221 = sphi 0, %s205
    $region4: #{tpu_custom_call.1} parent=1 // loop_header_branch
      %21 = sbr.rel (%p19) target = $region8
    $region5: #{tpu_custom_call.1} parent=1 // loop_body
      %s23 = ssub.s32 %s18, 1
      %s24 = ssub.s32 %s18, 2
      %s31 = sadd.s32 1, %s26
      %p32 = scmp.ge.s32.totalorder %s31, 1
      %s33 = scalar_select %p32, 0, %s31
      %s34 = sadd.s32 1, %s25
      %s35 = scalar_select %p32, %s34, %s25
      %p36 = scmp.ge.s32.totalorder %s35, 2
      %s37 = scalar_select %p36, 0, %s35
      %s38 = ssub.s32 %s25, %s37
      %p39 = scmp.eq.s32.totalorder %s38, 0
      %s41 = sadd.s32 %s40, 1
      %s42 = scalar_select %p39, %s40, %s41
      %p45 = pneg %p39
      %p46 = scmp.eq.s32.totalorder %s18, 1
      %p47 = por %p45, %p46
      %p48 = scmp.ne.s32.totalorder %s40, %s43
      %p49 = scmp.eq.s32.totalorder %s18, 0
      %p50 = por %p48, %p49
      %p51 = scmp.ne.s32.totalorder %s40, %s43
      %p52 = scmp.eq.s32.totalorder %s23, 1
      %p53 = por %p51, %p52
      %p54 = scmp.ne.s32.totalorder %s43, %s44
      %p55 = scmp.eq.s32.totalorder %s23, 0
      %p56 = por %p54, %p55
      %p57 = scmp.ne.s32.totalorder %s43, %s44
      %p58 = scmp.eq.s32.totalorder %s24, 1
      %p59 = por %p57, %p58
      %p61 = scmp.ne.s32.totalorder %s44, %s60
      %p62 = scmp.eq.s32.totalorder %s24, 0
      %p63 = por %p61, %p62
      %s64 = ssub.s32 %s25, %s37
      %s65 = ssub.s32 %s26, %s33
      %s66 = sor.u32 %s64, %s65
      %p67 = scmp.eq.s32.totalorder %s66, 0
      %s69 = sadd.s32 %s68, 1
      %s70 = scalar_select %p67, %s68, %s69
      %p73 = pneg %p67
      %p74 = scmp.eq.s32.totalorder %s18, 1
      %p75 = por %p73, %p74
      %p76 = scmp.ne.s32.totalorder %s68, %s71
      %p77 = scmp.eq.s32.totalorder %s18, 0
      %p78 = por %p76, %p77
      %p79 = scmp.ne.s32.totalorder %s68, %s71
      %p80 = scmp.eq.s32.totalorder %s23, 1
      %p81 = por %p79, %p80
      %p82 = scmp.ne.s32.totalorder %s71, %s72
      %p83 = scmp.eq.s32.totalorder %s23, 0
      %p84 = por %p82, %p83
      %p85 = scmp.ne.s32.totalorder %s71, %s72
      %p86 = scmp.eq.s32.totalorder %s24, 1
      %p87 = por %p85, %p86
      %p89 = scmp.ne.s32.totalorder %s72, %s88
      %p90 = scmp.eq.s32.totalorder %s24, 0
      %p91 = por %p89, %p90
      %s92 = ssub.s32 %s25, %s37
      %s93 = ssub.s32 %s26, %s33
      %s94 = sor.u32 %s92, %s93
      %p95 = scmp.eq.s32.totalorder %s94, 0
      %s97 = sadd.s32 %s96, 1
      %s98 = scalar_select %p95, %s96, %s97
      %p101 = pneg %p95
      %p102 = scmp.eq.s32.totalorder %s18, 1
      %p103 = por %p101, %p102
      %p104 = scmp.ne.s32.totalorder %s96, %s99
      %p105 = scmp.eq.s32.totalorder %s18, 0
      %p106 = por %p104, %p105
      %p107 = scmp.ne.s32.totalorder %s96, %s99
      %p108 = scmp.eq.s32.totalorder %s23, 1
      %p109 = por %p107, %p108
      %p110 = scmp.ne.s32.totalorder %s99, %s100
      %p111 = scmp.eq.s32.totalorder %s23, 0
      %p112 = por %p110, %p111
      %p113 = scmp.ne.s32.totalorder %s99, %s100
      %p114 = scmp.eq.s32.totalorder %s24, 1
      %p115 = por %p113, %p114
      %p117 = scmp.ne.s32.totalorder %s100, %s116
      %p118 = scmp.eq.s32.totalorder %s24, 0
      %p119 = por %p117, %p118
      %s120 = ssub.s32 %s25, %s37
      %s121 = ssub.s32 %s26, %s33
      %s122 = sor.u32 %s120, %s121
      %p123 = scmp.eq.s32.totalorder %s122, 0
      %s125 = sadd.s32 %s124, 1
      %s126 = scalar_select %p123, %s124, %s125
      %p129 = pneg %p123
      %p130 = scmp.eq.s32.totalorder %s18, 1
      %p131 = por %p129, %p130
      %p132 = scmp.ne.s32.totalorder %s124, %s127
      %p133 = scmp.eq.s32.totalorder %s18, 0
      %p134 = por %p132, %p133
      %p135 = scmp.ne.s32.totalorder %s124, %s127
      %p136 = scmp.eq.s32.totalorder %s23, 1
      %p137 = por %p135, %p136
      %p138 = scmp.ne.s32.totalorder %s127, %s128
      %p139 = scmp.eq.s32.totalorder %s23, 0
      %p140 = por %p138, %p139
      %p141 = scmp.ne.s32.totalorder %s127, %s128
      %p142 = scmp.eq.s32.totalorder %s24, 1
      %p143 = por %p141, %p142
      %p145 = scmp.ne.s32.totalorder %s128, %s144
      %p146 = scmp.eq.s32.totalorder %s24, 0
      %p147 = por %p145, %p146
      %s148 = ssub.s32 %s25, %s37
      %s149 = ssub.s32 %s26, %s33
      %s150 = sor.u32 %s148, %s149
      %p151 = scmp.eq.s32.totalorder %s150, 0
      %s153 = sadd.s32 %s152, 1
      %s154 = scalar_select %p151, %s152, %s153
      %p157 = pneg %p151
      %p158 = scmp.eq.s32.totalorder %s18, 1
      %p159 = por %p157, %p158
      %p160 = scmp.ne.s32.totalorder %s152, %s155
      %p161 = scmp.eq.s32.totalorder %s18, 0
      %p162 = por %p160, %p161
      %p163 = scmp.ne.s32.totalorder %s152, %s155
      %p164 = scmp.eq.s32.totalorder %s23, 1
      %p165 = por %p163, %p164
      %p166 = scmp.ne.s32.totalorder %s155, %s156
      %p167 = scmp.eq.s32.totalorder %s23, 0
      %p168 = por %p166, %p167
      %p169 = scmp.ne.s32.totalorder %s155, %s156
      %p170 = scmp.eq.s32.totalorder %s24, 1
      %p171 = por %p169, %p170
      %p173 = scmp.ne.s32.totalorder %s156, %s172
      %p174 = scmp.eq.s32.totalorder %s24, 0
      %p175 = por %p173, %p174
      %s177 = sadd.s32 %s176, 1
      %p180 = scmp.eq.s32.totalorder %s18, 1
      %p181 = scmp.ne.s32.totalorder %s176, %s178
      %p182 = scmp.eq.s32.totalorder %s18, 0
      %p183 = por %p181, %p182
      %p184 = scmp.ne.s32.totalorder %s176, %s178
      %p185 = scmp.eq.s32.totalorder %s23, 1
      %p186 = por %p184, %p185
      %p187 = scmp.ne.s32.totalorder %s178, %s179
      %p188 = scmp.eq.s32.totalorder %s23, 0
      %p189 = por %p187, %p188
      %p190 = scmp.ne.s32.totalorder %s178, %s179
      %p191 = scmp.eq.s32.totalorder %s24, 1
      %p192 = por %p190, %p191
      %p194 = scmp.ne.s32.totalorder %s179, %s193
      %p195 = scmp.eq.s32.totalorder %s24, 0
      %p196 = por %p194, %p195
      %s197 = ssub.s32 %s25, %s37
      %s198 = ssub.s32 %s26, %s33
      %s199 = sor.u32 %s197, %s198
      %p200 = scmp.eq.s32.totalorder %s199, 0
      %s202 = sadd.s32 %s201, 1
      %s203 = scalar_select %p200, %s201, %s202
      %p206 = pneg %p200
      %p207 = scmp.eq.s32.totalorder %s18, 1
      %p208 = por %p206, %p207
      %p209 = scmp.ne.s32.totalorder %s201, %s204
      %p210 = scmp.eq.s32.totalorder %s18, 0
      %p211 = por %p209, %p210
      %p212 = scmp.ne.s32.totalorder %s201, %s204
      %p213 = scmp.eq.s32.totalorder %s23, 1
      %p214 = por %p212, %p213
      %p215 = scmp.ne.s32.totalorder %s204, %s205
      %p216 = scmp.eq.s32.totalorder %s23, 0
      %p217 = por %p215, %p216
      %p218 = scmp.ne.s32.totalorder %s204, %s205
      %p219 = scmp.eq.s32.totalorder %s24, 1
      %p220 = por %p218, %p219
      %p222 = scmp.ne.s32.totalorder %s205, %s221
      %p223 = scmp.eq.s32.totalorder %s24, 0
      %p224 = por %p222, %p223
      %p225 = scmp.le.s32.totalorder 1, %s18
      %p226 = scmp.lt.s32.totalorder %s18, 3
      %p227 = pnand %p225, %p226
      %p228 = pneg %p227
      // Predicated region
      $region9: #{tpu_custom_call.1} parent=5 // pred_check
        _
      $region10: #{tpu_custom_call.1} parent=5 // pred_check_branch
        %230 = sbr.rel (%p227) target = $region12
      $region11: #{tpu_custom_call.1} parent=5 // pred_region
        %s231 = ssub.s32 %s18, 1
        // Predicated region
        $region13: #{tpu_custom_call.1} parent=11 // pred_check
          %p232 = pneg %p189
        $region14: #{tpu_custom_call.1} parent=11 // pred_check_branch
          %234 = sbr.rel (%p232) target = $region16
        $region15: #{tpu_custom_call.1} parent=11 // pred_region
          _
        $region16: #{tpu_custom_call.1} parent=11 // pred_fallthru
          _
      $region12: #{tpu_custom_call.1} parent=5 // pred_fallthru
        _
      %p235 = scmp.lt.s32.totalorder %s18, 2
      // Predicated region
      $region17: #{tpu_custom_call.1} parent=5 // pred_check
        %p236 = pneg %p235
      $region18: #{tpu_custom_call.1} parent=5 // pred_check_branch
        %238 = sbr.rel (%p236) target = $region20
      $region19: #{tpu_custom_call.1} parent=5 // pred_region
        // Predicated region
        $region21: #{tpu_custom_call.1} parent=19 // pred_check
          %p239 = pneg %p50
        $region22: #{tpu_custom_call.1} parent=19 // pred_check_branch
          %241 = sbr.rel (%p239) target = $region24
        $region23: #{tpu_custom_call.1} parent=19 // pred_region
          %p242 = scmp.lt.s32.totalorder %s25, 1
          %s243 = scalar_select %p242, %s25, 1
          %s244 = smul.addr %s243, 16
          %s245 = smul.addr %s244, 8
          %s246 = scalar_lea.vmem %s0, %s245
        $region24: #{tpu_custom_call.1} parent=19 // pred_fallthru
          _
        // Predicated region
        $region25: #{tpu_custom_call.1} parent=19 // pred_check
          %p247 = pneg %p78
        $region26: #{tpu_custom_call.1} parent=19 // pred_check_branch
          %249 = sbr.rel (%p247) target = $region28
        $region27: #{tpu_custom_call.1} parent=19 // pred_region
          %s250 = smul.u32 16, %s26
          %p251 = scmp.lt.s32.totalorder %s25, 1
          %s252 = scalar_select %p251, %s25, 1
          %p253 = scmp.lt.s32.totalorder %s250, 15
          %s254 = scalar_select %p253, %s250, 15
          %s255 = smul.addr %s252, 16
          %s256 = sadd.s32 %s254, %s255
          %s257 = smul.addr %s256, 8
          %s258 = scalar_lea.vmem %s1, %s257
          %s259 = smul.u32 16, %s26
        $region28: #{tpu_custom_call.1} parent=19 // pred_fallthru
          _
        // Predicated region
        $region29: #{tpu_custom_call.1} parent=19 // pred_check
          %p260 = pneg %p106
        $region30: #{tpu_custom_call.1} parent=19 // pred_check_branch
          %262 = sbr.rel (%p260) target = $region32
        $region31: #{tpu_custom_call.1} parent=19 // pred_region
          %s263 = sand.u32 %s96, 1
          %s264 = scalar_lea.sflag [#allocation3], %s263
          %s265 = sand.u32 %s96, 1
          %s266 = smul.addr %s265, 128
          %s267 = scalar_lea.vmem [#allocation2], %s266
          %s268 = smul.u32 16, %s26
          %s270 = ssub.s32 2048, 2048
          %271 = vsyncadd %s264, %s270
          %s272 = smul.addr %s25, 16
          %s273 = sadd.s32 %s268, %s272
          %s274 = smul.addr %s273, 128
          %s275 = scalar_lea.hbm %s2, %s274
          %s276 = sshll.u32 %s267, 4
          %s277 = int_to_ptr.vmem [resolvable:$true] %s276
          %282 = dma.hbm_to_vmem [thread:$0]  %s275, 2048, %s277, %s264, 128, 128, 8
        $region32: #{tpu_custom_call.1} parent=19 // pred_fallthru
          _
        // Predicated region
        $region33: #{tpu_custom_call.1} parent=19 // pred_check
          %p283 = pneg %p134
        $region34: #{tpu_custom_call.1} parent=19 // pred_check_branch
          %285 = sbr.rel (%p283) target = $region36
        $region35: #{tpu_custom_call.1} parent=19 // pred_region
          %s286 = smul.u32 16, %s26
          %p287 = scmp.lt.s32.totalorder %s25, 1
          %s288 = scalar_select %p287, %s25, 1
          %p289 = scmp.lt.s32.totalorder %s286, 15
          %s290 = scalar_select %p289, %s286, 15
          %s291 = smul.addr %s288, 16
          %s292 = sadd.s32 %s290, %s291
          %s293 = smul.addr %s292, 8
          %s294 = scalar_lea.vmem %s3, %s293
          %s295 = smul.u32 16, %s26
        $region36: #{tpu_custom_call.1} parent=19 // pred_fallthru
          _
        // Predicated region
        $region37: #{tpu_custom_call.1} parent=19 // pred_check
          %p296 = pneg %p162
        $region38: #{tpu_custom_call.1} parent=19 // pred_check_branch
          %298 = sbr.rel (%p296) target = $region40
        $region39: #{tpu_custom_call.1} parent=19 // pred_region
          %s299 = smul.u32 16, %s26
          %p300 = scmp.lt.s32.totalorder %s25, 1
          %s301 = scalar_select %p300, %s25, 1
          %p302 = scmp.lt.s32.totalorder %s299, 15
          %s303 = scalar_select %p302, %s299, 15
          %s304 = smul.addr %s301, 16
          %s305 = sadd.s32 %s303, %s304
          %s306 = smul.addr %s305, 8
          %s307 = scalar_lea.vmem %s4, %s306
          %s308 = smul.u32 16, %s26
        $region40: #{tpu_custom_call.1} parent=19 // pred_fallthru
          _
      $region20: #{tpu_custom_call.1} parent=5 // pred_fallthru
        _
      %p309 = scmp.le.s32.totalorder 1, %s18
      %p310 = scmp.lt.s32.totalorder %s18, 3
      %p311 = pnand %p309, %p310
      %p312 = pneg %p311
      // Predicated region
      $region41: #{tpu_custom_call.1} parent=5 // pred_check
        _
      $region42: #{tpu_custom_call.1} parent=5 // pred_check_branch
        %314 = sbr.rel (%p311) target = $region44
      $region43: #{tpu_custom_call.1} parent=5 // pred_region
        %s315 = ssub.s32 %s18, 1
        %s316 = sand.u32 %s99, 1
        %s317 = scalar_lea.sflag [#allocation3], %s316
        %s318 = sand.u32 %s99, 1
        %s319 = smul.addr %s318, 128
        %s320 = scalar_lea.vmem [#allocation2], %s319
        // Predicated region
        $region45: #{tpu_custom_call.1} parent=43 // pred_check
          %p321 = pneg %p112
        $region46: #{tpu_custom_call.1} parent=43 // pred_check_branch
          %323 = sbr.rel (%p321) target = $region48
        $region47: #{tpu_custom_call.1} parent=43 // pred_region
          %324 = dma.done %s317, 2048
        $region48: #{tpu_custom_call.1} parent=43 // pred_fallthru
          _
        %p325 = scmp.lt.s32.totalorder %s27, 1
        %s326 = scalar_select %p325, %s27, 1
        %s327 = smul.addr %s326, 16
        %s328 = smul.addr %s327, 8
        %s329 = scalar_lea.vmem %s0, %s328
        %p330 = pneg %p56
        %p331 = pneg %p53
        %s332 = smul.u32 16, %s28
        %p333 = scmp.lt.s32.totalorder %s27, 1
        %s334 = scalar_select %p333, %s27, 1
        %p335 = scmp.lt.s32.totalorder %s332, 15
        %s336 = scalar_select %p335, %s332, 15
        %s337 = smul.addr %s334, 16
        %s338 = sadd.s32 %s336, %s337
        %s339 = smul.addr %s338, 8
        %s340 = scalar_lea.vmem %s1, %s339
        %p341 = pneg %p84
        %p342 = pneg %p81
        %s343 = sand.u32 %s99, 1
        %s344 = scalar_lea.sflag [#allocation3], %s343
        %s345 = sand.u32 %s99, 1
        %s346 = smul.addr %s345, 128
        %s347 = scalar_lea.vmem [#allocation2], %s346
        %p348 = pneg %p112
        %p349 = pneg %p109
        %s350 = smul.u32 16, %s28
        %p351 = scmp.lt.s32.totalorder %s27, 1
        %s352 = scalar_select %p351, %s27, 1
        %p353 = scmp.lt.s32.totalorder %s350, 15
        %s354 = scalar_select %p353, %s350, 15
        %s355 = smul.addr %s352, 16
        %s356 = sadd.s32 %s354, %s355
        %s357 = smul.addr %s356, 8
        %s358 = scalar_lea.vmem %s3, %s357
        %p359 = pneg %p140
        %p360 = pneg %p137
        %s361 = smul.u32 16, %s28
        %p362 = scmp.lt.s32.totalorder %s27, 1
        %s363 = scalar_select %p362, %s27, 1
        %p364 = scmp.lt.s32.totalorder %s361, 15
        %s365 = scalar_select %p364, %s361, 15
        %s366 = smul.addr %s363, 16
        %s367 = sadd.s32 %s365, %s366
        %s368 = smul.addr %s367, 8
        %s369 = scalar_lea.vmem %s4, %s368
        %p370 = pneg %p168
        %p371 = pneg %p165
        %p372 = pneg %p189
        %p373 = pneg %p186
        %p374 = pneg %p217
        %p375 = pneg %p214
        %s376 = sand.u32 %s204, 1
        %s377 = scalar_lea.sflag [#allocation4], %s376
        %s378 = sand.u32 %s204, 1
        %s379 = smul.addr %s378, 128
        %s380 = scalar_lea.vmem [#allocation5], %s379
        %p381 = scmp.lt.s32.totalorder %s27, 1
        %s382 = scalar_select %p381, %s27, 1
        %s383 = smul.addr %s382, 16
        %s384 = smul.addr %s383, 8
        %s385 = scalar_lea.vmem %s0, %s384
        %s386 = smul.u32 16, %s28
        %p387 = scmp.lt.s32.totalorder %s27, 1
        %s388 = scalar_select %p387, %s27, 1
        %p389 = scmp.lt.s32.totalorder %s386, 15
        %s390 = scalar_select %p389, %s386, 15
        %s391 = smul.addr %s388, 16
        %s392 = sadd.s32 %s390, %s391
        %s393 = smul.addr %s392, 8
        %s394 = scalar_lea.vmem %s1, %s393
        %s395 = smul.u32 16, %s28
        %s396 = smul.u32 16, %s28
        %s397 = smul.u32 16, %s28
        %p398 = scmp.lt.s32.totalorder %s27, 1
        %s399 = scalar_select %p398, %s27, 1
        %p400 = scmp.lt.s32.totalorder %s397, 15
        %s401 = scalar_select %p400, %s397, 15
        %s402 = smul.addr %s399, 16
        %s403 = sadd.s32 %s401, %s402
        %s404 = smul.addr %s403, 8
        %s405 = scalar_lea.vmem %s3, %s404
        %s406 = smul.u32 16, %s28
        %s407 = smul.u32 16, %s28
        %p408 = scmp.lt.s32.totalorder %s27, 1
        %s409 = scalar_select %p408, %s27, 1
        %p410 = scmp.lt.s32.totalorder %s407, 15
        %s411 = scalar_select %p410, %s407, 15
        %s412 = smul.addr %s409, 16
        %s413 = sadd.s32 %s411, %s412
        %s414 = smul.addr %s413, 8
        %s415 = scalar_lea.vmem %s4, %s414
        %s416 = smul.u32 16, %s28
        %s417 = smul.u32 16, %s28
        %v418 = vld [vmem:[%s385] sm:$0xff]
        %v419 = vld [vmem:[%s385 + $0x8] sm:$0xff]
        %v420 = vld [vmem:[%s385 + $0x10] sm:$0xff]
        %v421 = vld [vmem:[%s385 + $0x18] sm:$0xff]
        %v422 = vld [vmem:[%s385 + $0x20] sm:$0xff]
        %v423 = vld [vmem:[%s385 + $0x28] sm:$0xff]
        %v424 = vld [vmem:[%s385 + $0x30] sm:$0xff]
        %v425 = vld [vmem:[%s385 + $0x38] sm:$0xff]
        %v426 = vld [vmem:[%s385 + $0x40] sm:$0xff]
        %v427 = vld [vmem:[%s385 + $0x48] sm:$0xff]
        %v428 = vld [vmem:[%s385 + $0x50] sm:$0xff]
        %v429 = vld [vmem:[%s385 + $0x58] sm:$0xff]
        %v430 = vld [vmem:[%s385 + $0x60] sm:$0xff]
        %v431 = vld [vmem:[%s385 + $0x68] sm:$0xff]
        %v432 = vld [vmem:[%s385 + $0x70] sm:$0xff]
        %v433 = vld [vmem:[%s385 + $0x78] sm:$0xff]
        %v434 = vld [vmem:[%s5] sm:$0x1]
        %v435 = vld [vmem:[%s394] sm:$0xff]
        %v436 = vld [vmem:[%s394 + $0x8] sm:$0xff]
        %v437 = vld [vmem:[%s394 + $0x10] sm:$0xff]
        %v438 = vld [vmem:[%s394 + $0x18] sm:$0xff]
        %v439 = vld [vmem:[%s394 + $0x20] sm:$0xff]
        %v440 = vld [vmem:[%s394 + $0x28] sm:$0xff]
        %v441 = vld [vmem:[%s394 + $0x30] sm:$0xff]
        %v442 = vld [vmem:[%s394 + $0x38] sm:$0xff]
        %v443 = vld [vmem:[%s394 + $0x40] sm:$0xff]
        %v444 = vld [vmem:[%s394 + $0x48] sm:$0xff]
        %v445 = vld [vmem:[%s394 + $0x50] sm:$0xff]
        %v446 = vld [vmem:[%s394 + $0x58] sm:$0xff]
        %v447 = vld [vmem:[%s394 + $0x60] sm:$0xff]
        %v448 = vld [vmem:[%s394 + $0x68] sm:$0xff]
        %v449 = vld [vmem:[%s394 + $0x70] sm:$0xff]
        %v450 = vld [vmem:[%s394 + $0x78] sm:$0xff]
        %451 = vmatprep.subr.mxu0 0.0
        %452 = vmatpush1.msra.mxu0 %v433
        %453 = vmatprep.subr.mxu0 0.0
        %454 = vmatpush1.msra.mxu0 %v432
        %455 = vmatprep.subr.mxu0 0.0
        %456 = vmatpush1.msra.mxu0 %v431
        %457 = vmatprep.subr.mxu0 0.0
        %458 = vmatpush1.msra.mxu0 %v430
        %459 = vmatprep.subr.mxu0 0.0
        %460 = vmatpush1.msra.mxu0 %v429
        %461 = vmatprep.subr.mxu0 0.0
        %462 = vmatpush1.msra.mxu0 %v428
        %463 = vmatprep.subr.mxu0 0.0
        %464 = vmatpush1.msra.mxu0 %v427
        %465 = vmatprep.subr.mxu0 0.0
        %466 = vmatpush1.msra.mxu0 %v426
        %467 = vmatprep.subr.mxu0 0.0
        %468 = vmatpush1.msra.mxu0 %v425
        %469 = vmatprep.subr.mxu0 0.0
        %470 = vmatpush1.msra.mxu0 %v424
        %471 = vmatprep.subr.mxu0 0.0
        %472 = vmatpush1.msra.mxu0 %v423
        %473 = vmatprep.subr.mxu0 0.0
        %474 = vmatpush1.msra.mxu0 %v422
        %475 = vmatprep.subr.mxu0 0.0
        %476 = vmatpush1.msra.mxu0 %v421
        %477 = vmatprep.subr.mxu0 0.0
        %478 = vmatpush1.msra.mxu0 %v420
        %479 = vmatprep.subr.mxu0 0.0
        %480 = vmatpush1.msra.mxu0 %v419
        %481 = vmatprep.subr.mxu0 0.0
        %482 = vmatpush1.msra.mxu0 %v418
        %483 = vmatprep.subr.mxu0 0.0
        %484 = vmatpush2.msra.mxu0 0.0
        %485 = vmatprep.subr.mxu0 0.0
        %486 = vmatpush2.msra.mxu0 0.0
        %487 = vmatprep.subr.mxu0 0.0
        %488 = vmatpush2.msra.mxu0 0.0
        %489 = vmatprep.subr.mxu0 0.0
        %490 = vmatpush2.msra.mxu0 0.0
        %491 = vmatprep.subr.mxu0 0.0
        %492 = vmatpush2.msra.mxu0 0.0
        %493 = vmatprep.subr.mxu0 0.0
        %494 = vmatpush2.msra.mxu0 0.0
        %495 = vmatprep.subr.mxu0 0.0
        %496 = vmatpush2.msra.mxu0 0.0
        %497 = vmatprep.subr.mxu0 0.0
        %498 = vmatpush2.msra.mxu0 0.0
        %499 = vmatprep.subr.mxu0 0.0
        %500 = vmatpush2.msra.mxu0 0.0
        %501 = vmatprep.subr.mxu0 0.0
        %502 = vmatpush2.msra.mxu0 0.0
        %503 = vmatprep.subr.mxu0 0.0
        %504 = vmatpush2.msra.mxu0 0.0
        %505 = vmatprep.subr.mxu0 0.0
        %506 = vmatpush2.msra.mxu0 0.0
        %507 = vmatprep.subr.mxu0 0.0
        %508 = vmatpush2.msra.mxu0 0.0
        %509 = vmatprep.subr.mxu0 0.0
        %510 = vmatpush2.msra.mxu0 0.0
        %511 = vmatprep.subr.mxu0 0.0
        %512 = vmatpush2.msra.mxu0 0.0
        %513 = vmatprep.subr.mxu0 0.0
        %514 = vmatpush2.msra.mxu0 0.0
        %515 = vmatprep.mubr.f32.mxu0 0.0
        %516 = vmatmul.mubr.f32.gmra.mxu0 %v435
        %v517 = vpop.f32.mrf.mxu0
        %v518 = vadd.f32 0.0, %v517
        %v519 = vpop.f32.mrf.mxu0
        %520 = vmatprep.mubr.f32.mxu0 0.0
        %521 = vmatmul.mubr.f32.gmra.mxu0 %v436
        %v522 = vpop.f32.mrf.mxu0
        %v523 = vadd.f32 0.0, %v522
        %v524 = vpop.f32.mrf.mxu0
        %525 = vmatprep.mubr.f32.mxu0 0.0
        %526 = vmatmul.mubr.f32.gmra.mxu0 %v437
        %v527 = vpop.f32.mrf.mxu0
        %v528 = vadd.f32 0.0, %v527
        %v529 = vpop.f32.mrf.mxu0
        %530 = vmatprep.mubr.f32.mxu0 0.0
        %531 = vmatmul.mubr.f32.gmra.mxu0 %v438
        %v532 = vpop.f32.mrf.mxu0
        %v533 = vadd.f32 0.0, %v532
        %v534 = vpop.f32.mrf.mxu0
        %535 = vmatprep.mubr.f32.mxu0 0.0
        %536 = vmatmul.mubr.f32.gmra.mxu0 %v439
        %v537 = vpop.f32.mrf.mxu0
        %v538 = vadd.f32 0.0, %v537
        %v539 = vpop.f32.mrf.mxu0
        %540 = vmatprep.mubr.f32.mxu0 0.0
        %541 = vmatmul.mubr.f32.gmra.mxu0 %v440
        %v542 = vpop.f32.mrf.mxu0
        %v543 = vadd.f32 0.0, %v542
        %v544 = vpop.f32.mrf.mxu0
        %545 = vmatprep.mubr.f32.mxu0 0.0
        %546 = vmatmul.mubr.f32.gmra.mxu0 %v441
        %v547 = vpop.f32.mrf.mxu0
        %v548 = vadd.f32 0.0, %v547
        %v549 = vpop.f32.mrf.mxu0
        %550 = vmatprep.mubr.f32.mxu0 0.0
        %551 = vmatmul.mubr.f32.gmra.mxu0 %v442
        %v552 = vpop.f32.mrf.mxu0
        %v553 = vadd.f32 0.0, %v552
        %v554 = vpop.f32.mrf.mxu0
        %555 = vmatprep.mubr.f32.mxu0 0.0
        %556 = vmatmul.mubr.f32.gmra.mxu0 %v443
        %v557 = vpop.f32.mrf.mxu0
        %v558 = vadd.f32 0.0, %v557
        %v559 = vpop.f32.mrf.mxu0
        %560 = vmatprep.mubr.f32.mxu0 0.0
        %561 = vmatmul.mubr.f32.gmra.mxu0 %v444
        %v562 = vpop.f32.mrf.mxu0
        %v563 = vadd.f32 0.0, %v562
        %v564 = vpop.f32.mrf.mxu0
        %565 = vmatprep.mubr.f32.mxu0 0.0
        %566 = vmatmul.mubr.f32.gmra.mxu0 %v445
        %v567 = vpop.f32.mrf.mxu0
        %v568 = vadd.f32 0.0, %v567
        %v569 = vpop.f32.mrf.mxu0
        %570 = vmatprep.mubr.f32.mxu0 0.0
        %571 = vmatmul.mubr.f32.gmra.mxu0 %v446
        %v572 = vpop.f32.mrf.mxu0
        %v573 = vadd.f32 0.0, %v572
        %v574 = vpop.f32.mrf.mxu0
        %575 = vmatprep.mubr.f32.mxu0 0.0
        %576 = vmatmul.mubr.f32.gmra.mxu0 %v447
        %v577 = vpop.f32.mrf.mxu0
        %v578 = vadd.f32 0.0, %v577
        %v579 = vpop.f32.mrf.mxu0
        %580 = vmatprep.mubr.f32.mxu0 0.0
        %581 = vmatmul.mubr.f32.gmra.mxu0 %v448
        %v582 = vpop.f32.mrf.mxu0
        %v583 = vadd.f32 0.0, %v582
        %v584 = vpop.f32.mrf.mxu0
        %585 = vmatprep.mubr.f32.mxu0 0.0
        %586 = vmatmul.mubr.f32.gmra.mxu0 %v449
        %v587 = vpop.f32.mrf.mxu0
        %v588 = vadd.f32 0.0, %v587
        %v589 = vpop.f32.mrf.mxu0
        %590 = vmatprep.mubr.f32.mxu0 0.0
        %591 = vmatmul.mubr.f32.gmra.mxu0 %v450
        %v592 = vpop.f32.mrf.mxu0
        %v593 = vadd.f32 0.0, %v592
        %v594 = vpop.f32.mrf.mxu0
        %595 = vdwg.mxu0
        %v596 = vld [vmem:[%s405] sm:$0xff]
        %v597 = vld [vmem:[%s405 + $0x8] sm:$0xff]
        %v598 = vld [vmem:[%s405 + $0x10] sm:$0xff]
        %v599 = vld [vmem:[%s405 + $0x18] sm:$0xff]
        %v600 = vld [vmem:[%s405 + $0x20] sm:$0xff]
        %v601 = vld [vmem:[%s405 + $0x28] sm:$0xff]
        %v602 = vld [vmem:[%s405 + $0x30] sm:$0xff]
        %v603 = vld [vmem:[%s405 + $0x38] sm:$0xff]
        %v604 = vld [vmem:[%s405 + $0x40] sm:$0xff]
        %v605 = vld [vmem:[%s405 + $0x48] sm:$0xff]
        %v606 = vld [vmem:[%s405 + $0x50] sm:$0xff]
        %v607 = vld [vmem:[%s405 + $0x58] sm:$0xff]
        %v608 = vld [vmem:[%s405 + $0x60] sm:$0xff]
        %v609 = vld [vmem:[%s405 + $0x68] sm:$0xff]
        %v610 = vld [vmem:[%s405 + $0x70] sm:$0xff]
        %v611 = vld [vmem:[%s405 + $0x78] sm:$0xff]
        %613 = vset.pattern.permute.xlu0 0
        %614 = vperm.xlu0 %613, %v596
        %v615 = vpop.permute.xlu0 %614
        %618 = vset.pattern.permute.xlu0 0
        %619 = vperm.xlu0 %618, %v597
        %v620 = vpop.permute.xlu0 %619
        %623 = vset.pattern.permute.xlu0 0
        %624 = vperm.xlu0 %623, %v598
        %v625 = vpop.permute.xlu0 %624
        %628 = vset.pattern.permute.xlu0 0
        %629 = vperm.xlu0 %628, %v599
        %v630 = vpop.permute.xlu0 %629
        %633 = vset.pattern.permute.xlu0 0
        %634 = vperm.xlu0 %633, %v600
        %v635 = vpop.permute.xlu0 %634
        %638 = vset.pattern.permute.xlu0 0
        %639 = vperm.xlu0 %638, %v601
        %v640 = vpop.permute.xlu0 %639
        %643 = vset.pattern.permute.xlu0 0
        %644 = vperm.xlu0 %643, %v602
        %v645 = vpop.permute.xlu0 %644
        %648 = vset.pattern.permute.xlu0 0
        %649 = vperm.xlu0 %648, %v603
        %v650 = vpop.permute.xlu0 %649
        %653 = vset.pattern.permute.xlu0 0
        %654 = vperm.xlu0 %653, %v604
        %v655 = vpop.permute.xlu0 %654
        %658 = vset.pattern.permute.xlu0 0
        %659 = vperm.xlu0 %658, %v605
        %v660 = vpop.permute.xlu0 %659
        %663 = vset.pattern.permute.xlu0 0
        %664 = vperm.xlu0 %663, %v606
        %v665 = vpop.permute.xlu0 %664
        %668 = vset.pattern.permute.xlu0 0
        %669 = vperm.xlu0 %668, %v607
        %v670 = vpop.permute.xlu0 %669
        %673 = vset.pattern.permute.xlu0 0
        %674 = vperm.xlu0 %673, %v608
        %v675 = vpop.permute.xlu0 %674
        %678 = vset.pattern.permute.xlu0 0
        %679 = vperm.xlu0 %678, %v609
        %v680 = vpop.permute.xlu0 %679
        %683 = vset.pattern.permute.xlu0 0
        %684 = vperm.xlu0 %683, %v610
        %v685 = vpop.permute.xlu0 %684
        %688 = vset.pattern.permute.xlu0 0
        %689 = vperm.xlu0 %688, %v611
        %v690 = vpop.permute.xlu0 %689
        %v692 = vmul.f32 %v518, %v615
        %v693 = vmul.f32 %v523, %v620
        %v694 = vmul.f32 %v528, %v625
        %v695 = vmul.f32 %v533, %v630
        %v696 = vmul.f32 %v538, %v635
        %v697 = vmul.f32 %v543, %v640
        %v698 = vmul.f32 %v548, %v645
        %v699 = vmul.f32 %v553, %v650
        %v700 = vmul.f32 %v558, %v655
        %v701 = vmul.f32 %v563, %v660
        %v702 = vmul.f32 %v568, %v665
        %v703 = vmul.f32 %v573, %v670
        %v704 = vmul.f32 %v578, %v675
        %v705 = vmul.f32 %v583, %v680
        %v706 = vmul.f32 %v588, %v685
        %v707 = vmul.f32 %v593, %v690
        %v709 = vlaneseq
        %v710 = vshrl.u32 %v709, 7
        %v711 = vsub.s32 0, %v710
        %v712 = vrot.slane %v434, %v711
        %v714 = vadd.f32 %v692, %v712
        %v715 = vadd.f32 %v693, %v712
        %v716 = vadd.f32 %v694, %v712
        %v717 = vadd.f32 %v695, %v712
        %v718 = vadd.f32 %v696, %v712
        %v719 = vadd.f32 %v697, %v712
        %v720 = vadd.f32 %v698, %v712
        %v721 = vadd.f32 %v699, %v712
        %v722 = vadd.f32 %v700, %v712
        %v723 = vadd.f32 %v701, %v712
        %v724 = vadd.f32 %v702, %v712
        %v725 = vadd.f32 %v703, %v712
        %v726 = vadd.f32 %v704, %v712
        %v727 = vadd.f32 %v705, %v712
        %v728 = vadd.f32 %v706, %v712
        %v729 = vadd.f32 %v707, %v712
        %v730 = vld [vmem:[%s320] sm:$0xff]
        %v731 = vld [vmem:[%s320 + $0x8] sm:$0xff]
        %v732 = vld [vmem:[%s320 + $0x10] sm:$0xff]
        %v733 = vld [vmem:[%s320 + $0x18] sm:$0xff]
        %v734 = vld [vmem:[%s320 + $0x20] sm:$0xff]
        %v735 = vld [vmem:[%s320 + $0x28] sm:$0xff]
        %v736 = vld [vmem:[%s320 + $0x30] sm:$0xff]
        %v737 = vld [vmem:[%s320 + $0x38] sm:$0xff]
        %v738 = vld [vmem:[%s320 + $0x40] sm:$0xff]
        %v739 = vld [vmem:[%s320 + $0x48] sm:$0xff]
        %v740 = vld [vmem:[%s320 + $0x50] sm:$0xff]
        %v741 = vld [vmem:[%s320 + $0x58] sm:$0xff]
        %v742 = vld [vmem:[%s320 + $0x60] sm:$0xff]
        %v743 = vld [vmem:[%s320 + $0x68] sm:$0xff]
        %v744 = vld [vmem:[%s320 + $0x70] sm:$0xff]
        %v745 = vld [vmem:[%s320 + $0x78] sm:$0xff]
        %746 = vmatprep.subr.mxu0 0.0
        %747 = vmatpush1.msra.mxu0 %v433
        %748 = vmatprep.subr.mxu0 0.0
        %749 = vmatpush1.msra.mxu0 %v432
        %750 = vmatprep.subr.mxu0 0.0
        %751 = vmatpush1.msra.mxu0 %v431
        %752 = vmatprep.subr.mxu0 0.0
        %753 = vmatpush1.msra.mxu0 %v430
        %754 = vmatprep.subr.mxu0 0.0
        %755 = vmatpush1.msra.mxu0 %v429
        %756 = vmatprep.subr.mxu0 0.0
        %757 = vmatpush1.msra.mxu0 %v428
        %758 = vmatprep.subr.mxu0 0.0
        %759 = vmatpush1.msra.mxu0 %v427
        %760 = vmatprep.subr.mxu0 0.0
        %761 = vmatpush1.msra.mxu0 %v426
        %762 = vmatprep.subr.mxu0 0.0
        %763 = vmatpush1.msra.mxu0 %v425
        %764 = vmatprep.subr.mxu0 0.0
        %765 = vmatpush1.msra.mxu0 %v424
        %766 = vmatprep.subr.mxu0 0.0
        %767 = vmatpush1.msra.mxu0 %v423
        %768 = vmatprep.subr.mxu0 0.0
        %769 = vmatpush1.msra.mxu0 %v422
        %770 = vmatprep.subr.mxu0 0.0
        %771 = vmatpush1.msra.mxu0 %v421
        %772 = vmatprep.subr.mxu0 0.0
        %773 = vmatpush1.msra.mxu0 %v420
        %774 = vmatprep.subr.mxu0 0.0
        %775 = vmatpush1.msra.mxu0 %v419
        %776 = vmatprep.subr.mxu0 0.0
        %777 = vmatpush1.msra.mxu0 %v418
        %778 = vmatprep.subr.mxu0 0.0
        %779 = vmatpush2.msra.mxu0 0.0
        %780 = vmatprep.subr.mxu0 0.0
        %781 = vmatpush2.msra.mxu0 0.0
        %782 = vmatprep.subr.mxu0 0.0
        %783 = vmatpush2.msra.mxu0 0.0
        %784 = vmatprep.subr.mxu0 0.0
        %785 = vmatpush2.msra.mxu0 0.0
        %786 = vmatprep.subr.mxu0 0.0
        %787 = vmatpush2.msra.mxu0 0.0
        %788 = vmatprep.subr.mxu0 0.0
        %789 = vmatpush2.msra.mxu0 0.0
        %790 = vmatprep.subr.mxu0 0.0
        %791 = vmatpush2.msra.mxu0 0.0
        %792 = vmatprep.subr.mxu0 0.0
        %793 = vmatpush2.msra.mxu0 0.0
        %794 = vmatprep.subr.mxu0 0.0
        %795 = vmatpush2.msra.mxu0 0.0
        %796 = vmatprep.subr.mxu0 0.0
        %797 = vmatpush2.msra.mxu0 0.0
        %798 = vmatprep.subr.mxu0 0.0
        %799 = vmatpush2.msra.mxu0 0.0
        %800 = vmatprep.subr.mxu0 0.0
        %801 = vmatpush2.msra.mxu0 0.0
        %802 = vmatprep.subr.mxu0 0.0
        %803 = vmatpush2.msra.mxu0 0.0
        %804 = vmatprep.subr.mxu0 0.0
        %805 = vmatpush2.msra.mxu0 0.0
        %806 = vmatprep.subr.mxu0 0.0
        %807 = vmatpush2.msra.mxu0 0.0
        %808 = vmatprep.subr.mxu0 0.0
        %809 = vmatpush2.msra.mxu0 0.0
        %810 = vmatprep.mubr.f32.mxu0 0.0
        %811 = vmatmul.mubr.f32.gmra.mxu0 %v730
        %v812 = vpop.f32.mrf.mxu0
        %v813 = vadd.f32 0.0, %v812
        %v814 = vpop.f32.mrf.mxu0
        %815 = vmatprep.mubr.f32.mxu0 0.0
        %816 = vmatmul.mubr.f32.gmra.mxu0 %v731
        %v817 = vpop.f32.mrf.mxu0
        %v818 = vadd.f32 0.0, %v817
        %v819 = vpop.f32.mrf.mxu0
        %820 = vmatprep.mubr.f32.mxu0 0.0
        %821 = vmatmul.mubr.f32.gmra.mxu0 %v732
        %v822 = vpop.f32.mrf.mxu0
        %v823 = vadd.f32 0.0, %v822
        %v824 = vpop.f32.mrf.mxu0
        %825 = vmatprep.mubr.f32.mxu0 0.0
        %826 = vmatmul.mubr.f32.gmra.mxu0 %v733
        %v827 = vpop.f32.mrf.mxu0
        %v828 = vadd.f32 0.0, %v827
        %v829 = vpop.f32.mrf.mxu0
        %830 = vmatprep.mubr.f32.mxu0 0.0
        %831 = vmatmul.mubr.f32.gmra.mxu0 %v734
        %v832 = vpop.f32.mrf.mxu0
        %v833 = vadd.f32 0.0, %v832
        %v834 = vpop.f32.mrf.mxu0
        %835 = vmatprep.mubr.f32.mxu0 0.0
        %836 = vmatmul.mubr.f32.gmra.mxu0 %v735
        %v837 = vpop.f32.mrf.mxu0
        %v838 = vadd.f32 0.0, %v837
        %v839 = vpop.f32.mrf.mxu0
        %840 = vmatprep.mubr.f32.mxu0 0.0
        %841 = vmatmul.mubr.f32.gmra.mxu0 %v736
        %v842 = vpop.f32.mrf.mxu0
        %v843 = vadd.f32 0.0, %v842
        %v844 = vpop.f32.mrf.mxu0
        %845 = vmatprep.mubr.f32.mxu0 0.0
        %846 = vmatmul.mubr.f32.gmra.mxu0 %v737
        %v847 = vpop.f32.mrf.mxu0
        %v848 = vadd.f32 0.0, %v847
        %v849 = vpop.f32.mrf.mxu0
        %850 = vmatprep.mubr.f32.mxu0 0.0
        %851 = vmatmul.mubr.f32.gmra.mxu0 %v738
        %v852 = vpop.f32.mrf.mxu0
        %v853 = vadd.f32 0.0, %v852
        %v854 = vpop.f32.mrf.mxu0
        %855 = vmatprep.mubr.f32.mxu0 0.0
        %856 = vmatmul.mubr.f32.gmra.mxu0 %v739
        %v857 = vpop.f32.mrf.mxu0
        %v858 = vadd.f32 0.0, %v857
        %v859 = vpop.f32.mrf.mxu0
        %860 = vmatprep.mubr.f32.mxu0 0.0
        %861 = vmatmul.mubr.f32.gmra.mxu0 %v740
        %v862 = vpop.f32.mrf.mxu0
        %v863 = vadd.f32 0.0, %v862
        %v864 = vpop.f32.mrf.mxu0
        %865 = vmatprep.mubr.f32.mxu0 0.0
        %866 = vmatmul.mubr.f32.gmra.mxu0 %v741
        %v867 = vpop.f32.mrf.mxu0
        %v868 = vadd.f32 0.0, %v867
        %v869 = vpop.f32.mrf.mxu0
        %870 = vmatprep.mubr.f32.mxu0 0.0
        %871 = vmatmul.mubr.f32.gmra.mxu0 %v742
        %v872 = vpop.f32.mrf.mxu0
        %v873 = vadd.f32 0.0, %v872
        %v874 = vpop.f32.mrf.mxu0
        %875 = vmatprep.mubr.f32.mxu0 0.0
        %876 = vmatmul.mubr.f32.gmra.mxu0 %v743
        %v877 = vpop.f32.mrf.mxu0
        %v878 = vadd.f32 0.0, %v877
        %v879 = vpop.f32.mrf.mxu0
        %880 = vmatprep.mubr.f32.mxu0 0.0
        %881 = vmatmul.mubr.f32.gmra.mxu0 %v744
        %v882 = vpop.f32.mrf.mxu0
        %v883 = vadd.f32 0.0, %v882
        %v884 = vpop.f32.mrf.mxu0
        %885 = vmatprep.mubr.f32.mxu0 0.0
        %886 = vmatmul.mubr.f32.gmra.mxu0 %v745
        %v887 = vpop.f32.mrf.mxu0
        %v888 = vadd.f32 0.0, %v887
        %v889 = vpop.f32.mrf.mxu0
        %890 = vdwg.mxu0
        %v891 = vld [vmem:[%s415] sm:$0xff]
        %v892 = vld [vmem:[%s415 + $0x8] sm:$0xff]
        %v893 = vld [vmem:[%s415 + $0x10] sm:$0xff]
        %v894 = vld [vmem:[%s415 + $0x18] sm:$0xff]
        %v895 = vld [vmem:[%s415 + $0x20] sm:$0xff]
        %v896 = vld [vmem:[%s415 + $0x28] sm:$0xff]
        %v897 = vld [vmem:[%s415 + $0x30] sm:$0xff]
        %v898 = vld [vmem:[%s415 + $0x38] sm:$0xff]
        %v899 = vld [vmem:[%s415 + $0x40] sm:$0xff]
        %v900 = vld [vmem:[%s415 + $0x48] sm:$0xff]
        %v901 = vld [vmem:[%s415 + $0x50] sm:$0xff]
        %v902 = vld [vmem:[%s415 + $0x58] sm:$0xff]
        %v903 = vld [vmem:[%s415 + $0x60] sm:$0xff]
        %v904 = vld [vmem:[%s415 + $0x68] sm:$0xff]
        %v905 = vld [vmem:[%s415 + $0x70] sm:$0xff]
        %v906 = vld [vmem:[%s415 + $0x78] sm:$0xff]
        %908 = vset.pattern.permute.xlu0 0
        %909 = vperm.xlu0 %908, %v891
        %v910 = vpop.permute.xlu0 %909
        %913 = vset.pattern.permute.xlu0 0
        %914 = vperm.xlu0 %913, %v892
        %v915 = vpop.permute.xlu0 %914
        %918 = vset.pattern.permute.xlu0 0
        %919 = vperm.xlu0 %918, %v893
        %v920 = vpop.permute.xlu0 %919
        %923 = vset.pattern.permute.xlu0 0
        %924 = vperm.xlu0 %923, %v894
        %v925 = vpop.permute.xlu0 %924
        %928 = vset.pattern.permute.xlu0 0
        %929 = vperm.xlu0 %928, %v895
        %v930 = vpop.permute.xlu0 %929
        %933 = vset.pattern.permute.xlu0 0
        %934 = vperm.xlu0 %933, %v896
        %v935 = vpop.permute.xlu0 %934
        %938 = vset.pattern.permute.xlu0 0
        %939 = vperm.xlu0 %938, %v897
        %v940 = vpop.permute.xlu0 %939
        %943 = vset.pattern.permute.xlu0 0
        %944 = vperm.xlu0 %943, %v898
        %v945 = vpop.permute.xlu0 %944
        %948 = vset.pattern.permute.xlu0 0
        %949 = vperm.xlu0 %948, %v899
        %v950 = vpop.permute.xlu0 %949
        %953 = vset.pattern.permute.xlu0 0
        %954 = vperm.xlu0 %953, %v900
        %v955 = vpop.permute.xlu0 %954
        %958 = vset.pattern.permute.xlu0 0
        %959 = vperm.xlu0 %958, %v901
        %v960 = vpop.permute.xlu0 %959
        %963 = vset.pattern.permute.xlu0 0
        %964 = vperm.xlu0 %963, %v902
        %v965 = vpop.permute.xlu0 %964
        %968 = vset.pattern.permute.xlu0 0
        %969 = vperm.xlu0 %968, %v903
        %v970 = vpop.permute.xlu0 %969
        %973 = vset.pattern.permute.xlu0 0
        %974 = vperm.xlu0 %973, %v904
        %v975 = vpop.permute.xlu0 %974
        %978 = vset.pattern.permute.xlu0 0
        %979 = vperm.xlu0 %978, %v905
        %v980 = vpop.permute.xlu0 %979
        %983 = vset.pattern.permute.xlu0 0
        %984 = vperm.xlu0 %983, %v906
        %v985 = vpop.permute.xlu0 %984
        %v987 = vmul.f32 %v813, %v910
        %v988 = vmul.f32 %v818, %v915
        %v989 = vmul.f32 %v823, %v920
        %v990 = vmul.f32 %v828, %v925
        %v991 = vmul.f32 %v833, %v930
        %v992 = vmul.f32 %v838, %v935
        %v993 = vmul.f32 %v843, %v940
        %v994 = vmul.f32 %v848, %v945
        %v995 = vmul.f32 %v853, %v950
        %v996 = vmul.f32 %v858, %v955
        %v997 = vmul.f32 %v863, %v960
        %v998 = vmul.f32 %v868, %v965
        %v999 = vmul.f32 %v873, %v970
        %v1000 = vmul.f32 %v878, %v975
        %v1001 = vmul.f32 %v883, %v980
        %v1002 = vmul.f32 %v888, %v985
        %v1003 = vadd.f32 %v987, %v712
        %v1004 = vadd.f32 %v988, %v712
        %v1005 = vadd.f32 %v989, %v712
        %v1006 = vadd.f32 %v990, %v712
        %v1007 = vadd.f32 %v991, %v712
        %v1008 = vadd.f32 %v992, %v712
        %v1009 = vadd.f32 %v993, %v712
        %v1010 = vadd.f32 %v994, %v712
        %v1011 = vadd.f32 %v995, %v712
        %v1012 = vadd.f32 %v996, %v712
        %v1013 = vadd.f32 %v997, %v712
        %v1014 = vadd.f32 %v998, %v712
        %v1015 = vadd.f32 %v999, %v712
        %v1016 = vadd.f32 %v1000, %v712
        %v1017 = vadd.f32 %v1001, %v712
        %v1018 = vadd.f32 %v1002, %v712
        %v1019 = vxor.u32 %v1003, 2147483648
        %v1020 = vxor.u32 %v1004, 2147483648
        %v1021 = vxor.u32 %v1005, 2147483648
        %v1022 = vxor.u32 %v1006, 2147483648
        %v1023 = vxor.u32 %v1007, 2147483648
        %v1024 = vxor.u32 %v1008, 2147483648
        %v1025 = vxor.u32 %v1009, 2147483648
        %v1026 = vxor.u32 %v1010, 2147483648
        %v1027 = vxor.u32 %v1011, 2147483648
        %v1028 = vxor.u32 %v1012, 2147483648
        %v1029 = vxor.u32 %v1013, 2147483648
        %v1030 = vxor.u32 %v1014, 2147483648
        %v1031 = vxor.u32 %v1015, 2147483648
        %v1032 = vxor.u32 %v1016, 2147483648
        %v1033 = vxor.u32 %v1017, 2147483648
        %v1034 = vxor.u32 %v1018, 2147483648
        %v1035 = vmul.f32 %v1019, 1.442695
        %v1036 = vpow.pop %v1035
        %v1037 = vmul.f32 %v1020, 1.442695
        %v1038 = vpow.pop %v1037
        %v1039 = vmul.f32 %v1021, 1.442695
        %v1040 = vpow.pop %v1039
        %v1041 = vmul.f32 %v1022, 1.442695
        %v1042 = vpow.pop %v1041
        %v1043 = vmul.f32 %v1023, 1.442695
        %v1044 = vpow.pop %v1043
        %v1045 = vmul.f32 %v1024, 1.442695
        %v1046 = vpow.pop %v1045
        %v1047 = vmul.f32 %v1025, 1.442695
        %v1048 = vpow.pop %v1047
        %v1049 = vmul.f32 %v1026, 1.442695
        %v1050 = vpow.pop %v1049
        %v1051 = vmul.f32 %v1027, 1.442695
        %v1052 = vpow.pop %v1051
        %v1053 = vmul.f32 %v1028, 1.442695
        %v1054 = vpow.pop %v1053
        %v1055 = vmul.f32 %v1029, 1.442695
        %v1056 = vpow.pop %v1055
        %v1057 = vmul.f32 %v1030, 1.442695
        %v1058 = vpow.pop %v1057
        %v1059 = vmul.f32 %v1031, 1.442695
        %v1060 = vpow.pop %v1059
        %v1061 = vmul.f32 %v1032, 1.442695
        %v1062 = vpow.pop %v1061
        %v1063 = vmul.f32 %v1033, 1.442695
        %v1064 = vpow.pop %v1063
        %v1065 = vmul.f32 %v1034, 1.442695
        %v1066 = vpow.pop %v1065
        %v1067 = vadd.f32 %v1036, 1.0
        %v1068 = vadd.f32 %v1038, 1.0
        %v1069 = vadd.f32 %v1040, 1.0
        %v1070 = vadd.f32 %v1042, 1.0
        %v1071 = vadd.f32 %v1044, 1.0
        %v1072 = vadd.f32 %v1046, 1.0
        %v1073 = vadd.f32 %v1048, 1.0
        %v1074 = vadd.f32 %v1050, 1.0
        %v1075 = vadd.f32 %v1052, 1.0
        %v1076 = vadd.f32 %v1054, 1.0
        %v1077 = vadd.f32 %v1056, 1.0
        %v1078 = vadd.f32 %v1058, 1.0
        %v1079 = vadd.f32 %v1060, 1.0
        %v1080 = vadd.f32 %v1062, 1.0
        %v1081 = vadd.f32 %v1064, 1.0
        %v1082 = vadd.f32 %v1066, 1.0
        %v1083 = vrcp.pop %v1067
        %v1084 = vmul.f32 1.0, %v1083
        %v1085 = vrcp.pop %v1068
        %v1086 = vmul.f32 1.0, %v1085
        %v1087 = vrcp.pop %v1069
        %v1088 = vmul.f32 1.0, %v1087
        %v1089 = vrcp.pop %v1070
        %v1090 = vmul.f32 1.0, %v1089
        %v1091 = vrcp.pop %v1071
        %v1092 = vmul.f32 1.0, %v1091
        %v1093 = vrcp.pop %v1072
        %v1094 = vmul.f32 1.0, %v1093
        %v1095 = vrcp.pop %v1073
        %v1096 = vmul.f32 1.0, %v1095
        %v1097 = vrcp.pop %v1074
        %v1098 = vmul.f32 1.0, %v1097
        %v1099 = vrcp.pop %v1075
        %v1100 = vmul.f32 1.0, %v1099
        %v1101 = vrcp.pop %v1076
        %v1102 = vmul.f32 1.0, %v1101
        %v1103 = vrcp.pop %v1077
        %v1104 = vmul.f32 1.0, %v1103
        %v1105 = vrcp.pop %v1078
        %v1106 = vmul.f32 1.0, %v1105
        %v1107 = vrcp.pop %v1079
        %v1108 = vmul.f32 1.0, %v1107
        %v1109 = vrcp.pop %v1080
        %v1110 = vmul.f32 1.0, %v1109
        %v1111 = vrcp.pop %v1081
        %v1112 = vmul.f32 1.0, %v1111
        %v1113 = vrcp.pop %v1082
        %v1114 = vmul.f32 1.0, %v1113
        %v1115 = vmul.f32 %v1084, 0.2
        %v1116 = vmul.f32 %v1086, 0.2
        %v1117 = vmul.f32 %v1088, 0.2
        %v1118 = vmul.f32 %v1090, 0.2
        %v1119 = vmul.f32 %v1092, 0.2
        %v1120 = vmul.f32 %v1094, 0.2
        %v1121 = vmul.f32 %v1096, 0.2
        %v1122 = vmul.f32 %v1098, 0.2
        %v1123 = vmul.f32 %v1100, 0.2
        %v1124 = vmul.f32 %v1102, 0.2
        %v1125 = vmul.f32 %v1104, 0.2
        %v1126 = vmul.f32 %v1106, 0.2
        %v1127 = vmul.f32 %v1108, 0.2
        %v1128 = vmul.f32 %v1110, 0.2
        %v1129 = vmul.f32 %v1112, 0.2
        %v1130 = vmul.f32 %v1114, 0.2
        %v1131 = vsub.f32 %v1003, %v714
        %v1132 = vsub.f32 %v1004, %v715
        %v1133 = vsub.f32 %v1005, %v716
        %v1134 = vsub.f32 %v1006, %v717
        %v1135 = vsub.f32 %v1007, %v718
        %v1136 = vsub.f32 %v1008, %v719
        %v1137 = vsub.f32 %v1009, %v720
        %v1138 = vsub.f32 %v1010, %v721
        %v1139 = vsub.f32 %v1011, %v722
        %v1140 = vsub.f32 %v1012, %v723
        %v1141 = vsub.f32 %v1013, %v724
        %v1142 = vsub.f32 %v1014, %v725
        %v1143 = vsub.f32 %v1015, %v726
        %v1144 = vsub.f32 %v1016, %v727
        %v1145 = vsub.f32 %v1017, %v728
        %v1146 = vsub.f32 %v1018, %v729
        %v1147 = vmul.f32 %v1115, %v1131
        %v1148 = vmul.f32 %v1116, %v1132
        %v1149 = vmul.f32 %v1117, %v1133
        %v1150 = vmul.f32 %v1118, %v1134
        %v1151 = vmul.f32 %v1119, %v1135
        %v1152 = vmul.f32 %v1120, %v1136
        %v1153 = vmul.f32 %v1121, %v1137
        %v1154 = vmul.f32 %v1122, %v1138
        %v1155 = vmul.f32 %v1123, %v1139
        %v1156 = vmul.f32 %v1124, %v1140
        %v1157 = vmul.f32 %v1125, %v1141
        %v1158 = vmul.f32 %v1126, %v1142
        %v1159 = vmul.f32 %v1127, %v1143
        %v1160 = vmul.f32 %v1128, %v1144
        %v1161 = vmul.f32 %v1129, %v1145
        %v1162 = vmul.f32 %v1130, %v1146
        %v1163 = vadd.f32 %v714, %v1147
        %v1164 = vadd.f32 %v715, %v1148
        %v1165 = vadd.f32 %v716, %v1149
        %v1166 = vadd.f32 %v717, %v1150
        %v1167 = vadd.f32 %v718, %v1151
        %v1168 = vadd.f32 %v719, %v1152
        %v1169 = vadd.f32 %v720, %v1153
        %v1170 = vadd.f32 %v721, %v1154
        %v1171 = vadd.f32 %v722, %v1155
        %v1172 = vadd.f32 %v723, %v1156
        %v1173 = vadd.f32 %v724, %v1157
        %v1174 = vadd.f32 %v725, %v1158
        %v1175 = vadd.f32 %v726, %v1159
        %v1176 = vadd.f32 %v727, %v1160
        %v1177 = vadd.f32 %v728, %v1161
        %v1178 = vadd.f32 %v729, %v1162
        %v1179 = vmax.f32 %v1163, 0.0
        %v1180 = vmax.f32 %v1164, 0.0
        %v1181 = vmax.f32 %v1165, 0.0
        %v1182 = vmax.f32 %v1166, 0.0
        %v1183 = vmax.f32 %v1167, 0.0
        %v1184 = vmax.f32 %v1168, 0.0
        %v1185 = vmax.f32 %v1169, 0.0
        %v1186 = vmax.f32 %v1170, 0.0
        %v1187 = vmax.f32 %v1171, 0.0
        %v1188 = vmax.f32 %v1172, 0.0
        %v1189 = vmax.f32 %v1173, 0.0
        %v1190 = vmax.f32 %v1174, 0.0
        %v1191 = vmax.f32 %v1175, 0.0
        %v1192 = vmax.f32 %v1176, 0.0
        %v1193 = vmax.f32 %v1177, 0.0
        %v1194 = vmax.f32 %v1178, 0.0
        %1195 = vst [vmem:[%s380] sm:$0xff] %v1179
        %1196 = vst [vmem:[%s380 + $0x8] sm:$0xff] %v1180
        %1197 = vst [vmem:[%s380 + $0x10] sm:$0xff] %v1181
        %1198 = vst [vmem:[%s380 + $0x18] sm:$0xff] %v1182
        %1199 = vst [vmem:[%s380 + $0x20] sm:$0xff] %v1183
        %1200 = vst [vmem:[%s380 + $0x28] sm:$0xff] %v1184
        %1201 = vst [vmem:[%s380 + $0x30] sm:$0xff] %v1185
        %1202 = vst [vmem:[%s380 + $0x38] sm:$0xff] %v1186
        %1203 = vst [vmem:[%s380 + $0x40] sm:$0xff] %v1187
        %1204 = vst [vmem:[%s380 + $0x48] sm:$0xff] %v1188
        %1205 = vst [vmem:[%s380 + $0x50] sm:$0xff] %v1189
        %1206 = vst [vmem:[%s380 + $0x58] sm:$0xff] %v1190
        %1207 = vst [vmem:[%s380 + $0x60] sm:$0xff] %v1191
        %1208 = vst [vmem:[%s380 + $0x68] sm:$0xff] %v1192
        %1209 = vst [vmem:[%s380 + $0x70] sm:$0xff] %v1193
        %1210 = vst [vmem:[%s380 + $0x78] sm:$0xff] %v1194
        %s1211 = sand.u32 %s204, 1
        %s1212 = scalar_lea.sflag [#allocation4], %s1211
        %s1213 = sand.u32 %s204, 1
        %s1214 = smul.addr %s1213, 128
        %s1215 = scalar_lea.vmem [#allocation5], %s1214
        // Predicated region
        $region49: #{tpu_custom_call.1} parent=43 // pred_check
          %p1216 = pneg %p214
        $region50: #{tpu_custom_call.1} parent=43 // pred_check_branch
          %1218 = sbr.rel (%p1216) target = $region52
        $region51: #{tpu_custom_call.1} parent=43 // pred_region
          %s1219 = smul.u32 16, %s28
          %s1221 = ssub.s32 2048, 2048
          %1222 = vsyncadd %s1212, %s1221
          %s1223 = smul.addr %s27, 16
          %s1224 = sadd.s32 %s1219, %s1223
          %s1225 = smul.addr %s1224, 128
          %s1226 = scalar_lea.hbm %s6, %s1225
          %s1227 = sshll.u32 %s1215, 4
          %s1228 = int_to_ptr.vmem [resolvable:$true] %s1227
          %1233 = dma.vmem_to_hbm [thread:$0]  %s1228, 2048, %s1226, %s1212, 128, 128, 8
        $region52: #{tpu_custom_call.1} parent=43 // pred_fallthru
          _
      $region44: #{tpu_custom_call.1} parent=5 // pred_fallthru
        _
      %p1234 = scmp.le.s32.totalorder 2, %s18
      // Predicated region
      $region53: #{tpu_custom_call.1} parent=5 // pred_check
        %p1235 = pneg %p1234
      $region54: #{tpu_custom_call.1} parent=5 // pred_check_branch
        %1237 = sbr.rel (%p1235) target = $region56
      $region55: #{tpu_custom_call.1} parent=5 // pred_region
        %s1238 = ssub.s32 %s18, 2
        // Predicated region
        $region57: #{tpu_custom_call.1} parent=55 // pred_check
          %p1239 = pneg %p220
        $region58: #{tpu_custom_call.1} parent=55 // pred_check_branch
          %1241 = sbr.rel (%p1239) target = $region60
        $region59: #{tpu_custom_call.1} parent=55 // pred_region
          %s1242 = sand.u32 %s205, 1
          %s1243 = scalar_lea.sflag [#allocation4], %s1242
          %s1244 = sand.u32 %s205, 1
          %s1245 = smul.addr %s1244, 128
          %s1246 = scalar_lea.vmem [#allocation5], %s1245
          %1247 = dma.done %s1243, 2048
        $region60: #{tpu_custom_call.1} parent=55 // pred_fallthru
          _
      $region56: #{tpu_custom_call.1} parent=5 // pred_fallthru
        _
    $region6: #{tpu_custom_call.1} parent=1 // loop_footer
      %s22 = sadd.s32 1, %s18
    $region7: #{tpu_custom_call.1} parent=1 // loop_footer_branch
      %17 = sbr.rel target = $region3
    $region8: #{tpu_custom_call.1} parent=1 // loop_exit
      _
    %1248 = vsyncpa [#allocation3], 1
    %s1249 = scalar_lea.sflag [#allocation3], 1
    %1250 = vsyncpa %s1249, 1
    %1251 = vsyncpa [#allocation4], 1
    %s1252 = scalar_lea.sflag [#allocation4], 1
    %1253 = vsyncpa %s1252, 1

</llo_original>
